<compile_context>
chip_gen: v7x
topology: tpu7x:2x2x1
jax: 0.10.0
libtpu: 0.0.40
codegen_flags: <defaults>
</compile_context>

<pallas_src>
import functools

import numpy as np
import jax
import jax.numpy as jnp
from jax.experimental import pallas as pl
from jax.experimental.pallas import tpu as pltpu


def _round_up(x, m):
    return ((x + m - 1) // m) * m


def _yolo_kernel(pred_ref, rowp_ref, gxy_ref, out_ref, *, C, GG, Bt):
    """Decode + in-VMEM layout transpose for Bt batch elements.

    pred_ref : VMEM (Bt, Cp, GGp)  raw conv rows (channel = anchor*attrs + attr)
    rowp_ref : VMEM (Cp, 4)        per-channel [sel_gx, sel_gy, is_wh, mul]
    gxy_ref  : VMEM (2, GGp)       per-cell [grid_x, grid_y]
    out_ref  : VMEM (Bt, GG, C)    torch-layout rows (cell major, channel minor)
    """
    p = pred_ref[...].astype(jnp.float32)            # (Bt, Cp, GGp)

    rowp = rowp_ref[...]                             # (Cp, 4)
    sel_gx = rowp[:, 0:1]                            # (Cp, 1)
    sel_gy = rowp[:, 1:2]
    is_wh = rowp[:, 2:3]
    mul = rowp[:, 3:4]

    gx = gxy_ref[0:1, :]                             # (1, GGp)
    gy = gxy_ref[1:2, :]
    add = sel_gx * gx + sel_gy * gy                  # (Cp, GGp), built in vregs

    # x/y/conf/class rows: sigmoid (+ cell offset); w/h rows: exp.
    decoded = jnp.where(is_wh > 0.5, jnp.exp(p), jax.nn.sigmoid(p) + add)
    decoded = decoded * mul                          # (Bt, Cp, GGp)

    # Minor-dims transpose in VMEM to the torch layout.  The source tile is
    # (Cp, GGp) = (multiple of 8, multiple of 128), i.e. fully vreg-aligned.
    for i in range(Bt):                              # small static unroll
        t = jnp.swapaxes(decoded[i], 0, 1)           # (GGp, Cp)
        out_ref[i] = t[:GG, :C].astype(out_ref.dtype)


def _row_params(anchors, num_classes, stride, Cp):
    """Tiny per-channel decode constants: [sel_gx, sel_gy, is_wh, mul]."""
    A = len(anchors)
    attrs = 5 + num_classes
    rowp = np.zeros((Cp, 4), np.float32)
    for a in range(A):
        for t in range(attrs):
            r = a * attrs + t
            if t == 0:
                rowp[r] = (1.0, 0.0, 0.0, float(stride))
            elif t == 1:
                rowp[r] = (0.0, 1.0, 0.0, float(stride))
            elif t == 2:
                rowp[r] = (0.0, 0.0, 1.0, (anchors[a][0] / stride) * stride)
            elif t == 3:
                rowp[r] = (0.0, 0.0, 1.0, (anchors[a][1] / stride) * stride)
            else:
                rowp[r] = (0.0, 0.0, 0.0, 1.0)
    return jnp.asarray(rowp)


def _grid_xy(G, GGp):
    """Tiny per-cell constants: grid_x = gg % G, grid_y = gg // G."""
    gxy = np.zeros((2, GGp), np.float32)
    gxy[0, : G * G] = np.tile(np.arange(G, dtype=np.float32), G)
    gxy[1, : G * G] = np.repeat(np.arange(G, dtype=np.float32), G)
    return jnp.asarray(gxy)


def _pick_batch_block(B, per_elem_vmem_bytes):
    budget = 8 * 1024 * 1024          # double-buffered tiles; safe for v5e's 16 MiB scoped default
    cap = max(1, budget // max(per_elem_vmem_bytes, 1))
    cap = min(cap, 16)                # bound the in-kernel unroll
    if B > 1:
        cap = min(cap, max(1, B // 2))  # keep >= 2 "parallel" steps for v7x's 2 TCs
    bt = 1
    for d in range(1, B + 1):
        if B % d == 0 and d <= cap:
            bt = d
    return bt


def yolo_layer_forward(prediction, img_size, num_classes, anchors,
                       *, out_dtype=jnp.float32):
    """Inference branch of YOLOLayer.forward (targets=None)."""
    B, Ch, G, G2 = prediction.shape
    assert G == G2
    A = len(anchors)
    attrs = 5 + num_classes
    assert Ch == A * attrs, f"channels {Ch} != num_anchors*{attrs}"
    assert img_size % G == 0, "img_size must be a multiple of grid_size"
    stride = img_size // G
    GG = G * G
    C = Ch
    Cp = _round_up(C, 8)       # sublane-aligned VMEM block (no HBM pad)
    GGp = _round_up(GG, 128)   # lane-aligned VMEM block (no HBM pad)

    # Free reshape (contiguous merge); stays in the conv head's dtype in HBM.
    pred = prediction.reshape(B, C, GG)

    rowp = _row_params(anchors, num_classes, stride, Cp)   # (Cp, 4)  ~KiB
    gxy = _grid_xy(G, GGp)                                 # (2, GGp) ~KiB

    in_bytes = jnp.dtype(prediction.dtype).itemsize
    out_bytes = jnp.dtype(out_dtype).itemsize
    per_elem = 2 * (Cp * GGp * in_bytes + GG * C * out_bytes)
    Bt = _pick_batch_block(B, per_elem)

    kernel = functools.partial(_yolo_kernel, C=C, GG=GG, Bt=Bt)

    out = pl.pallas_call(
        kernel,
        out_shape=jax.ShapeDtypeStruct((B, GG, C), out_dtype),
        grid=(B // Bt,),
        in_specs=[
            # Over-sized (8,128)-aligned block; Pallas clamps the copy to (C, GG).
            pl.BlockSpec((Bt, Cp, GGp), lambda b: (b, 0, 0)),
            pl.BlockSpec((Cp, 4), lambda b: (0, 0)),        # tiny, grid-invariant
            pl.BlockSpec((2, GGp), lambda b: (0, 0)),       # tiny, grid-invariant
        ],
        out_specs=pl.BlockSpec((Bt, GG, C), lambda b: (b, 0, 0)),
        compiler_params=pltpu.CompilerParams(
            dimension_semantics=("parallel",)),
    )(pred, rowp, gxy)

    # (B, GG, A*attrs) is bit-identical (flat layout) to the torch output
    # (B, G*G*A, attrs): this reshape is free, no extra HBM pass.
    return out.reshape(B, GG * A, attrs)


def yolo_layer_reference(prediction, img_size, num_classes, anchors):
    """Pure-JAX transcription of the PyTorch forward (targets=None)."""
    B, Ch, G, _ = prediction.shape
    A = len(anchors)
    attrs = 5 + num_classes
    stride = img_size // G
    pred = prediction.astype(jnp.float32).reshape(B, A, attrs, G, G).transpose(0, 1, 3, 4, 2)

    x = jax.nn.sigmoid(pred[..., 0])
    y = jax.nn.sigmoid(pred[..., 1])
    w = pred[..., 2]
    h = pred[..., 3]
    conf = jax.nn.sigmoid(pred[..., 4])
    cls = jax.nn.sigmoid(pred[..., 5:])

    grid_x = jnp.tile(jnp.arange(G, dtype=jnp.float32), (G, 1)).reshape(1, 1, G, G)
    grid_y = jnp.tile(jnp.arange(G, dtype=jnp.float32), (G, 1)).T.reshape(1, 1, G, G)
    sa = jnp.array([(a0 / stride, a1 / stride) for (a0, a1) in anchors], jnp.float32)
    aw = sa[:, 0].reshape(1, A, 1, 1)
    ah = sa[:, 1].reshape(1, A, 1, 1)

    bx = x + grid_x
    by = y + grid_y
    bw = jnp.exp(w) * aw
    bh = jnp.exp(h) * ah
    boxes = jnp.stack([bx, by, bw, bh], axis=-1)

    out = jnp.concatenate(
        [boxes.reshape(B, -1, 4) * stride,
         conf.reshape(B, -1, 1),
         cls.reshape(B, -1, num_classes)], axis=-1)
    out = (out.reshape(B, A, G, G, attrs)
              .transpose(0, 2, 3, 1, 4)
              .reshape(B, G * G * A, attrs))
    return out


if __name__ == "__main__":
    # Small, deterministic config.
    anchors = [(10.0, 13.0), (16.0, 30.0), (33.0, 23.0)]     # 3 anchors
    num_classes = 2
    num_anchors = len(anchors)
    bbox_attrs = 5 + num_classes                             # 7
    B, G = 2, 16
    img_size = 64                                            # stride = 4

    key = jax.random.PRNGKey(0)
    # PyTorch conv output layout: NCHW, C = num_anchors * bbox_attrs = 21
    prediction = jax.random.normal(
        key, (B, num_anchors * bbox_attrs, G, G), dtype=jnp.float32)

    out = yolo_layer_forward(prediction, img_size, num_classes, anchors)
    out = jax.block_until_ready(out)

    ref = yolo_layer_reference(prediction, img_size, num_classes, anchors)
    assert out.shape == (B, G * G * num_anchors, bbox_attrs), out.shape
    assert jnp.allclose(out, ref, atol=1e-5, rtol=1e-5), "mismatch vs reference"

    print("KERNEL_OK")
</pallas_src>

<mosaic_0001>
module attributes {stable_mosaic.version = 11 : i64} {
  func.func @_yolo_kernel(%arg0: i32, %arg1: memref<1x24x256xf32, #tpu.memory_space<vmem>>, %arg2: memref<24x4xf32, #tpu.memory_space<vmem>>, %arg3: memref<2x256xf32, #tpu.memory_space<vmem>>, %arg4: memref<1x256x21xf32, #tpu.memory_space<vmem>>) attributes {dimension_semantics = [#tpu.dimension_semantics<parallel>], iteration_bounds = array<i64: 2>, scalar_prefetch = 0 : i64, scratch_operands = 0 : i64, tpu.core_type = #tpu.core_type<tc>, window_params = [{transform_indices = @transform_0, window_bounds = array<i64: 1, 24, 256>}, {pipeline_mode = #tpu.pipeline_mode<synchronous>, transform_indices = @transform_1, window_bounds = array<i64: 24, 4>}, {pipeline_mode = #tpu.pipeline_mode<synchronous>, transform_indices = @transform_2, window_bounds = array<i64: 2, 256>}, {transform_indices = @transform_3, window_bounds = array<i64: 1, 256, 21>}]} {
    %c0 = arith.constant 0 : index
    %c0_0 = arith.constant 0 : index
    %c0_1 = arith.constant 0 : index
    %0 = vector.load %arg1[%c0, %c0_0, %c0_1] : memref<1x24x256xf32, #tpu.memory_space<vmem>>, vector<1x24x256xf32>
    %c0_2 = arith.constant 0 : index
    %c0_3 = arith.constant 0 : index
    %1 = vector.load %arg2[%c0_2, %c0_3] : memref<24x4xf32, #tpu.memory_space<vmem>>, vector<24x4xf32>
    %2 = vector.extract_strided_slice %1 {offsets = [0, 0], sizes = [24, 1], strides = [1, 1]} : vector<24x4xf32> to vector<24x1xf32>
    %3 = vector.extract_strided_slice %1 {offsets = [0, 1], sizes = [24, 1], strides = [1, 1]} : vector<24x4xf32> to vector<24x1xf32>
    %4 = vector.extract_strided_slice %1 {offsets = [0, 2], sizes = [24, 1], strides = [1, 1]} : vector<24x4xf32> to vector<24x1xf32>
    %5 = vector.extract_strided_slice %1 {offsets = [0, 3], sizes = [24, 1], strides = [1, 1]} : vector<24x4xf32> to vector<24x1xf32>
    %c0_4 = arith.constant 0 : index
    %c0_5 = arith.constant 0 : index
    %6 = vector.load %arg3[%c0_4, %c0_5] : memref<2x256xf32, #tpu.memory_space<vmem>>, vector<1x256xf32>
    %c1 = arith.constant 1 : index
    %c0_6 = arith.constant 0 : index
    %7 = vector.load %arg3[%c1, %c0_6] : memref<2x256xf32, #tpu.memory_space<vmem>>, vector<1x256xf32>
    %8 = vector.broadcast %2 : vector<24x1xf32> to vector<24x256xf32>
    %9 = vector.broadcast %6 : vector<1x256xf32> to vector<24x256xf32>
    %10 = arith.mulf %8, %9 : vector<24x256xf32>
    %11 = vector.broadcast %3 : vector<24x1xf32> to vector<24x256xf32>
    %12 = vector.broadcast %7 : vector<1x256xf32> to vector<24x256xf32>
    %13 = arith.mulf %11, %12 : vector<24x256xf32>
    %14 = arith.addf %10, %13 : vector<24x256xf32>
    %cst = arith.constant 5.000000e-01 : f32
    %15 = vector.broadcast %cst : f32 to vector<24x1xf32>
    %16 = arith.cmpf ogt, %4, %15 : vector<24x1xf32>
    %17 = math.exp %0 : vector<1x24x256xf32>
    %18 = arith.negf %0 : vector<1x24x256xf32>
    %19 = math.exp %18 : vector<1x24x256xf32>
    %cst_7 = arith.constant 1.000000e+00 : f32
    %20 = vector.broadcast %cst_7 : f32 to vector<1x24x256xf32>
    %21 = arith.addf %20, %19 : vector<1x24x256xf32>
    %22 = arith.divf %20, %21 : vector<1x24x256xf32>
    %23 = vector.shape_cast %14 : vector<24x256xf32> to vector<1x24x256xf32>
    %24 = arith.addf %22, %23 : vector<1x24x256xf32>
    %25 = vector.shape_cast %16 : vector<24x1xi1> to vector<1x24x1xi1>
    %26 = vector.broadcast %25 : vector<1x24x1xi1> to vector<1x24x256xi1>
    %27 = arith.select %26, %17, %24 : vector<1x24x256xi1>, vector<1x24x256xf32>
    %28 = vector.shape_cast %5 : vector<24x1xf32> to vector<1x24x1xf32>
    %29 = vector.broadcast %28 : vector<1x24x1xf32> to vector<1x24x256xf32>
    %30 = arith.mulf %27, %29 : vector<1x24x256xf32>
    %31 = vector.shape_cast %30 : vector<1x24x256xf32> to vector<24x256xf32>
    %32 = tpu.transpose %31, [1, 0] : vector<24x256xf32> -> vector<256x24xf32>
    %33 = vector.extract_strided_slice %32 {offsets = [0, 0], sizes = [256, 21], strides = [1, 1]} : vector<256x24xf32> to vector<256x21xf32>
    %c0_8 = arith.constant 0 : index
    %c0_9 = arith.constant 0 : index
    %c0_10 = arith.constant 0 : index
    %34 = vector.load %arg4[%c0_8, %c0_9, %c0_10] : memref<1x256x21xf32, #tpu.memory_space<vmem>>, vector<1x256x21xf32>
    %35 = vector.shape_cast %34 : vector<1x256x21xf32> to vector<256x21xf32>
    %36 = vector.shape_cast %33 : vector<256x21xf32> to vector<1x256x21xf32>
    tpu.vector_store %arg4[%c0_8, %c0_9, %c0_10], %36 {strides = array<i32>} : memref<1x256x21xf32, #tpu.memory_space<vmem>>, vector<1x256x21xf32>,
    return
  }
  func.func @transform_0(%arg0: i32) -> (i32, i32, i32) {
    %c0_i32 = arith.constant 0 : i32
    %c0_i32_0 = arith.constant 0 : i32
    %c0_i32_1 = arith.constant 0 : i32
    return %arg0, %c0_i32, %c0_i32_0 : i32, i32, i32
  }
  func.func @transform_1(%arg0: i32) -> (i32, i32) {
    %c0_i32 = arith.constant 0 : i32
    %c0_i32_0 = arith.constant 0 : i32
    %c0_i32_1 = arith.constant 0 : i32
    return %c0_i32, %c0_i32_0 : i32, i32
  }
  func.func @transform_2(%arg0: i32) -> (i32, i32) {
    %c0_i32 = arith.constant 0 : i32
    %c0_i32_0 = arith.constant 0 : i32
    %c0_i32_1 = arith.constant 0 : i32
    return %c0_i32, %c0_i32_0 : i32, i32
  }
  func.func @transform_3(%arg0: i32) -> (i32, i32, i32) {
    %c0_i32 = arith.constant 0 : i32
    %c0_i32_0 = arith.constant 0 : i32
    %c0_i32_1 = arith.constant 0 : i32
    return %arg0, %c0_i32, %c0_i32_0 : i32, i32, i32
  }
}

</mosaic_0001>

<llo_original>
// kernel: tpu_custom_call.1
$region0: #{tpu_custom_call.1}
  #allocation0 [shape = 'u32[]', space=smem, size = 0x4, offset = 0x4, fixed_abs, tag = 'smem constant byte address 0x4 - core index']
  #allocation1 [shape = 'u32[144,128]{1,0:T(1,128)}', space=vmem, size = 0x12000, scoped, tag = 'internal scratch']
  %s0 = inlined_call_operand.vmem [shape: f32[2,21,256], index: 0, kind: input, shape index: {}]
  %s1 = inlined_call_operand.vmem [shape: f32[24,4], index: 1, kind: input, shape index: {}]
  %s2 = inlined_call_operand.vmem [shape: f32[2,256], index: 2, kind: input, shape index: {}]
  %s3 = inlined_call_operand.vmem [shape: f32[2,256,21], index: 3, kind: output, shape index: {}]
  %s4 = sld [smem:[#allocation0]]
  $region45: #{tpu_custom_call.1} parent=0
    _
  %s6 = ssub.s32 1, %s4
  %s7 = scalar_select 0, %s6, %s4
  loop: start=0, step=1, limit=4
  $region2: #{tpu_custom_call.1} parent=0 // loop_pre_header
    _
  $region3: #{tpu_custom_call.1} parent=0 // loop_header
    %s9 = sphi 0, %s13
    %p10 = scmp.ge.s32.totalorder %s9, 4
    %s19 = sphi 0, %s21
    %s22 = sphi 0, %s19
    %s23 = sphi 0, %s22
    %s39 = sphi 0, %s23
    %s43 = sphi 0, %s43
    %s45 = sphi 0, %s43
    %s46 = sphi 0, %s45
    %s60 = sphi 0, %s46
    %s64 = sphi 0, %s64
    %s66 = sphi 0, %s64
    %s67 = sphi 0, %s66
    %s81 = sphi 0, %s67
    %s87 = sphi 0, %s89
    %s90 = sphi 0, %s87
    %s91 = sphi 0, %s90
    %s107 = sphi 0, %s91
  $region4: #{tpu_custom_call.1} parent=0 // loop_header_branch
    %12 = sbr.rel (%p10) target = $region8
  $region5: #{tpu_custom_call.1} parent=0 // loop_body
    %s14 = ssub.s32 %s9, 1
    %s15 = ssub.s32 %s9, 2
    %s16 = sadd.s32 %s9, 1
    %s17 = ssub.s32 %s9, %s16
    %p18 = scmp.eq.s32.totalorder %s17, 0
    %s20 = sadd.s32 %s19, 1
    %s21 = scalar_select %p18, %s19, %s20
    %p24 = pneg %p18
    %p25 = scmp.eq.s32.totalorder %s9, 1
    %p26 = por %p24, %p25
    %p27 = scmp.ne.s32.totalorder %s19, %s22
    %p28 = scmp.eq.s32.totalorder %s9, 0
    %p29 = por %p27, %p28
    %p30 = scmp.ne.s32.totalorder %s19, %s22
    %p31 = scmp.eq.s32.totalorder %s14, 1
    %p32 = por %p30, %p31
    %p33 = scmp.ne.s32.totalorder %s22, %s23
    %p34 = scmp.eq.s32.totalorder %s14, 0
    %p35 = por %p33, %p34
    %p36 = scmp.ne.s32.totalorder %s22, %s23
    %p37 = scmp.eq.s32.totalorder %s15, 1
    %p38 = por %p36, %p37
    %p40 = scmp.ne.s32.totalorder %s23, %s39
    %p41 = scmp.eq.s32.totalorder %s15, 0
    %p42 = por %p40, %p41
    %s44 = sadd.s32 %s43, 1
    %p47 = scmp.eq.s32.totalorder %s9, 1
    %p48 = scmp.ne.s32.totalorder %s43, %s45
    %p49 = scmp.eq.s32.totalorder %s9, 0
    %p50 = por %p48, %p49
    %p51 = scmp.ne.s32.totalorder %s43, %s45
    %p52 = scmp.eq.s32.totalorder %s14, 1
    %p53 = por %p51, %p52
    %p54 = scmp.ne.s32.totalorder %s45, %s46
    %p55 = scmp.eq.s32.totalorder %s14, 0
    %p56 = por %p54, %p55
    %p57 = scmp.ne.s32.totalorder %s45, %s46
    %p58 = scmp.eq.s32.totalorder %s15, 1
    %p59 = por %p57, %p58
    %p61 = scmp.ne.s32.totalorder %s46, %s60
    %p62 = scmp.eq.s32.totalorder %s15, 0
    %p63 = por %p61, %p62
    %s65 = sadd.s32 %s64, 1
    %p68 = scmp.eq.s32.totalorder %s9, 1
    %p69 = scmp.ne.s32.totalorder %s64, %s66
    %p70 = scmp.eq.s32.totalorder %s9, 0
    %p71 = por %p69, %p70
    %p72 = scmp.ne.s32.totalorder %s64, %s66
    %p73 = scmp.eq.s32.totalorder %s14, 1
    %p74 = por %p72, %p73
    %p75 = scmp.ne.s32.totalorder %s66, %s67
    %p76 = scmp.eq.s32.totalorder %s14, 0
    %p77 = por %p75, %p76
    %p78 = scmp.ne.s32.totalorder %s66, %s67
    %p79 = scmp.eq.s32.totalorder %s15, 1
    %p80 = por %p78, %p79
    %p82 = scmp.ne.s32.totalorder %s67, %s81
    %p83 = scmp.eq.s32.totalorder %s15, 0
    %p84 = por %p82, %p83
    %s85 = ssub.s32 %s9, %s16
    %p86 = scmp.eq.s32.totalorder %s85, 0
    %s88 = sadd.s32 %s87, 1
    %s89 = scalar_select %p86, %s87, %s88
    %p92 = pneg %p86
    %p93 = scmp.eq.s32.totalorder %s9, 1
    %p94 = por %p92, %p93
    %p95 = scmp.ne.s32.totalorder %s87, %s90
    %p96 = scmp.eq.s32.totalorder %s9, 0
    %p97 = por %p95, %p96
    %p98 = scmp.ne.s32.totalorder %s87, %s90
    %p99 = scmp.eq.s32.totalorder %s14, 1
    %p100 = por %p98, %p99
    %p101 = scmp.ne.s32.totalorder %s90, %s91
    %p102 = scmp.eq.s32.totalorder %s14, 0
    %p103 = por %p101, %p102
    %p104 = scmp.ne.s32.totalorder %s90, %s91
    %p105 = scmp.eq.s32.totalorder %s15, 1
    %p106 = por %p104, %p105
    %p108 = scmp.ne.s32.totalorder %s91, %s107
    %p109 = scmp.eq.s32.totalorder %s15, 0
    %p110 = por %p108, %p109
    %p111 = scmp.le.s32.totalorder 1, %s9
    %p112 = scmp.lt.s32.totalorder %s9, 3
    %p113 = pnand %p111, %p112
    %p114 = pneg %p113
    // Predicated region
    $region9: #{tpu_custom_call.1} parent=5 // pred_check
      _
    $region10: #{tpu_custom_call.1} parent=5 // pred_check_branch
      %116 = sbr.rel (%p113) target = $region12
    $region11: #{tpu_custom_call.1} parent=5 // pred_region
      %s117 = ssub.s32 %s9, 1
      // Predicated region
      $region13: #{tpu_custom_call.1} parent=11 // pred_check
        %p118 = pneg %p56
      $region14: #{tpu_custom_call.1} parent=11 // pred_check_branch
        %120 = sbr.rel (%p118) target = $region16
      $region15: #{tpu_custom_call.1} parent=11 // pred_region
        _
      $region16: #{tpu_custom_call.1} parent=11 // pred_fallthru
        _
      // Predicated region
      $region17: #{tpu_custom_call.1} parent=11 // pred_check
        %p121 = pneg %p77
      $region18: #{tpu_custom_call.1} parent=11 // pred_check_branch
        %123 = sbr.rel (%p121) target = $region20
      $region19: #{tpu_custom_call.1} parent=11 // pred_region
        _
      $region20: #{tpu_custom_call.1} parent=11 // pred_fallthru
        _
    $region12: #{tpu_custom_call.1} parent=5 // pred_fallthru
      _
    %p124 = scmp.lt.s32.totalorder %s9, 2
    // Predicated region
    $region21: #{tpu_custom_call.1} parent=5 // pred_check
      %p125 = pneg %p124
    $region22: #{tpu_custom_call.1} parent=5 // pred_check_branch
      %127 = sbr.rel (%p125) target = $region24
    $region23: #{tpu_custom_call.1} parent=5 // pred_region
      // Predicated region
      $region25: #{tpu_custom_call.1} parent=23 // pred_check
        %p128 = pneg %p29
      $region26: #{tpu_custom_call.1} parent=23 // pred_check_branch
        %130 = sbr.rel (%p128) target = $region28
      $region27: #{tpu_custom_call.1} parent=23 // pred_region
        %p131 = scmp.lt.s32.totalorder %s9, 1
        %s132 = scalar_select %p131, %s9, 1
        %s133 = smul.addr %s132, 6
        %s134 = smul.addr %s133, 8
        %s135 = scalar_lea.vmem %s0, %s134
      $region28: #{tpu_custom_call.1} parent=23 // pred_fallthru
        _
    $region24: #{tpu_custom_call.1} parent=5 // pred_fallthru
      _
    %p136 = scmp.le.s32.totalorder 1, %s9
    %p137 = scmp.lt.s32.totalorder %s9, 3
    %p138 = pnand %p136, %p137
    %p139 = pneg %p138
    // Predicated region
    $region29: #{tpu_custom_call.1} parent=5 // pred_check
      _
    $region30: #{tpu_custom_call.1} parent=5 // pred_check_branch
      %141 = sbr.rel (%p138) target = $region32
    $region31: #{tpu_custom_call.1} parent=5 // pred_region
      %s142 = ssub.s32 %s9, 1
      %p143 = scmp.lt.s32.totalorder %s14, 1
      %s144 = scalar_select %p143, %s14, 1
      %s145 = smul.addr %s144, 6
      %s146 = smul.addr %s145, 8
      %s147 = scalar_lea.vmem %s0, %s146
      %p148 = pneg %p35
      %p149 = pneg %p32
      %p150 = pneg %p56
      %p151 = pneg %p53
      %p152 = pneg %p77
      %p153 = pneg %p74
      %p154 = pneg %p103
      %p155 = pneg %p100
      %p156 = scmp.lt.s32.totalorder %s14, 1
      %s157 = scalar_select %p156, %s14, 1
      %s158 = smul.addr %s157, 32
      %s159 = smul.addr %s158, 8
      %s160 = scalar_lea.vmem %s3, %s159
      %p161 = scmp.lt.s32.totalorder %s14, 1
      %s162 = scalar_select %p161, %s14, 1
      %s163 = smul.addr %s162, 6
      %s164 = smul.addr %s163, 8
      %s165 = scalar_lea.vmem %s0, %s164
      %p166 = scmp.lt.s32.totalorder %s14, 1
      %s167 = scalar_select %p166, %s14, 1
      %s168 = smul.addr %s167, 32
      %s169 = smul.addr %s168, 8
      %s170 = scalar_lea.vmem %s3, %s169
      %v171 = vld [vmem:[%s165] sm:$0xff]
      %v172 = vld [vmem:[%s165 + $0x8] sm:$0xff]
      %v173 = vld [vmem:[%s165 + $0x10] sm:$0xff]
      %v174 = vld [vmem:[%s165 + $0x18] sm:$0xff]
      %v175 = vld [vmem:[%s165 + $0x20] sm:$0xff]
      %v176 = vld [vmem:[%s165 + $0x28] sm:$0xff]
      %v177 = vld [vmem:[%s1] sm:$0xff]
      %v178 = vld [vmem:[%s1 + $0x8] sm:$0xff]
      %v179 = vld [vmem:[%s1 + $0x10] sm:$0xff]
      %v180 = vld [vmem:[%s2] ss:$2 sm:$0x3]
      %s181 = scalar_lea.vmem %s2, 1
      %v182 = vld [vmem:[%s181] ss:$2 sm:$0x3]
      %184 = vset.pattern.permute.xlu0 0
      %185 = vperm.xlu0 %184, %v177
      %v186 = vpop.permute.xlu0 %185
      %189 = vset.pattern.permute.xlu0 0
      %190 = vperm.xlu0 %189, %v178
      %v191 = vpop.permute.xlu0 %190
      %194 = vset.pattern.permute.xlu0 0
      %195 = vperm.xlu0 %194, %v179
      %v196 = vpop.permute.xlu0 %195
      %v199 = vlaneseq
      %v200 = vshrl.u32 %v199, 7
      %v201 = vsub.s32 0, %v200
      %v202 = vrot.slane %v180, %v201
      %v203 = vlaneseq
      %v204 = vshrl.u32 %v203, 7
      %v205 = vsub.s32 1, %v204
      %v206 = vrot.slane %v180, %v205
      %v209 = vmul.f32 %v186, %v202
      %v210 = vmul.f32 %v186, %v206
      %v211 = vmul.f32 %v191, %v202
      %v212 = vmul.f32 %v191, %v206
      %v213 = vmul.f32 %v196, %v202
      %v214 = vmul.f32 %v196, %v206
      %215 = vset.pattern.permute.xlu0 1
      %216 = vperm.xlu0 %215, %v177
      %v217 = vpop.permute.xlu0 %216
      %219 = vset.pattern.permute.xlu0 1
      %220 = vperm.xlu0 %219, %v178
      %v221 = vpop.permute.xlu0 %220
      %223 = vset.pattern.permute.xlu0 1
      %224 = vperm.xlu0 %223, %v179
      %v225 = vpop.permute.xlu0 %224
      %v228 = vlaneseq
      %v229 = vshrl.u32 %v228, 7
      %v230 = vsub.s32 0, %v229
      %v231 = vrot.slane %v182, %v230
      %v232 = vlaneseq
      %v233 = vshrl.u32 %v232, 7
      %v234 = vsub.s32 1, %v233
      %v235 = vrot.slane %v182, %v234
      %v238 = vmul.f32 %v217, %v231
      %v239 = vmul.f32 %v217, %v235
      %v240 = vmul.f32 %v221, %v231
      %v241 = vmul.f32 %v221, %v235
      %v242 = vmul.f32 %v225, %v231
      %v243 = vmul.f32 %v225, %v235
      %v244 = vadd.f32 %v209, %v238
      %v245 = vadd.f32 %v210, %v239
      %v246 = vadd.f32 %v211, %v240
      %v247 = vadd.f32 %v212, %v241
      %v248 = vadd.f32 %v213, %v242
      %v249 = vadd.f32 %v214, %v243
      %vm250 = vcmp.gt.f32.partialorder %v177, 0.5
      %vm251 = vcmp.gt.f32.partialorder %v178, 0.5
      %vm252 = vcmp.gt.f32.partialorder %v179, 0.5
      %v253 = vmul.f32 %v171, 1.442695
      %v254 = vpow.pop %v253
      %v255 = vmul.f32 %v172, 1.442695
      %v256 = vpow.pop %v255
      %v257 = vmul.f32 %v173, 1.442695
      %v258 = vpow.pop %v257
      %v259 = vmul.f32 %v174, 1.442695
      %v260 = vpow.pop %v259
      %v261 = vmul.f32 %v175, 1.442695
      %v262 = vpow.pop %v261
      %v263 = vmul.f32 %v176, 1.442695
      %v264 = vpow.pop %v263
      %v265 = vxor.u32 %v171, 2147483648
      %v266 = vxor.u32 %v172, 2147483648
      %v267 = vxor.u32 %v173, 2147483648
      %v268 = vxor.u32 %v174, 2147483648
      %v269 = vxor.u32 %v175, 2147483648
      %v270 = vxor.u32 %v176, 2147483648
      %v271 = vmul.f32 %v265, 1.442695
      %v272 = vpow.pop %v271
      %v273 = vmul.f32 %v266, 1.442695
      %v274 = vpow.pop %v273
      %v275 = vmul.f32 %v267, 1.442695
      %v276 = vpow.pop %v275
      %v277 = vmul.f32 %v268, 1.442695
      %v278 = vpow.pop %v277
      %v279 = vmul.f32 %v269, 1.442695
      %v280 = vpow.pop %v279
      %v281 = vmul.f32 %v270, 1.442695
      %v282 = vpow.pop %v281
      %v283 = vadd.f32 %v272, 1.0
      %v284 = vadd.f32 %v274, 1.0
      %v285 = vadd.f32 %v276, 1.0
      %v286 = vadd.f32 %v278, 1.0
      %v287 = vadd.f32 %v280, 1.0
      %v288 = vadd.f32 %v282, 1.0
      %v289 = vrcp.pop %v283
      %v290 = vmul.f32 1.0, %v289
      %v291 = vrcp.pop %v284
      %v292 = vmul.f32 1.0, %v291
      %v293 = vrcp.pop %v285
      %v294 = vmul.f32 1.0, %v293
      %v295 = vrcp.pop %v286
      %v296 = vmul.f32 1.0, %v295
      %v297 = vrcp.pop %v287
      %v298 = vmul.f32 1.0, %v297
      %v299 = vrcp.pop %v288
      %v300 = vmul.f32 1.0, %v299
      %v301 = vadd.f32 %v290, %v244
      %v302 = vadd.f32 %v292, %v245
      %v303 = vadd.f32 %v294, %v246
      %v304 = vadd.f32 %v296, %v247
      %v305 = vadd.f32 %v298, %v248
      %v306 = vadd.f32 %v300, %v249
      %v307 = vsel %vm250, 1, 0
      %v308 = vsel %vm251, 1, 0
      %v309 = vsel %vm252, 1, 0
      %310 = vset.pattern.permute.xlu0 2
      %311 = vperm.xlu0 %310, %v307
      %v312 = vpop.permute.xlu0 %311
      %313 = vset.pattern.permute.xlu0 2
      %314 = vperm.xlu0 %313, %v308
      %v315 = vpop.permute.xlu0 %314
      %316 = vset.pattern.permute.xlu0 2
      %317 = vperm.xlu0 %316, %v309
      %v318 = vpop.permute.xlu0 %317
      %vm319 = vcmp.eq.s32.totalorder %v312, 1
      %vm320 = vcmp.eq.s32.totalorder %v315, 1
      %vm321 = vcmp.eq.s32.totalorder %v318, 1
      %v322 = vsel %vm319, %v254, %v301
      %v323 = vsel %vm319, %v256, %v302
      %v324 = vsel %vm320, %v258, %v303
      %v325 = vsel %vm320, %v260, %v304
      %v326 = vsel %vm321, %v262, %v305
      %v327 = vsel %vm321, %v264, %v306
      %328 = vset.pattern.permute.xlu0 3
      %329 = vperm.xlu0 %328, %v177
      %v330 = vpop.permute.xlu0 %329
      %332 = vset.pattern.permute.xlu0 3
      %333 = vperm.xlu0 %332, %v178
      %v334 = vpop.permute.xlu0 %333
      %336 = vset.pattern.permute.xlu0 3
      %337 = vperm.xlu0 %336, %v179
      %v338 = vpop.permute.xlu0 %337
      %v340 = vmul.f32 %v322, %v330
      %v341 = vmul.f32 %v323, %v330
      %v342 = vmul.f32 %v324, %v334
      %v343 = vmul.f32 %v325, %v334
      %v344 = vmul.f32 %v326, %v338
      %v345 = vmul.f32 %v327, %v338
      %346 = vxpose.xlu0.b32.start [1/16] %v340, 128
      %347 = vxpose.xlu0.b32.cont [2/16] %v342, 128
      %348 = vxpose.xlu0.b32.cont [3/16] %v344, 128
      %349 = vxpose.xlu0.b32.cont [4/16] 0.0, 128
      %350 = vxpose.xlu0.b32.cont [5/16] 0.0, 128
      %351 = vxpose.xlu0.b32.cont [6/16] 0.0, 128
      %352 = vxpose.xlu0.b32.cont [7/16] 0.0, 128
      %353 = vxpose.xlu0.b32.cont [8/16] 0.0, 128
      %354 = vxpose.xlu0.b32.cont [9/16] 0.0, 128
      %355 = vxpose.xlu0.b32.cont [10/16] 0.0, 128
      %356 = vxpose.xlu0.b32.cont [11/16] 0.0, 128
      %357 = vxpose.xlu0.b32.cont [12/16] 0.0, 128
      %358 = vxpose.xlu0.b32.cont [13/16] 0.0, 128
      %359 = vxpose.xlu0.b32.cont [14/16] 0.0, 128
      %360 = vxpose.xlu0.b32.cont [15/16] 0.0, 128
      %361 = vxpose.xlu0.b32.end [16/16] 0.0, 128
      %v362 = vpop.trf.xlu0
      %v363 = vpop.trf.xlu0
      %v364 = vpop.trf.xlu0
      %v365 = vpop.trf.xlu0
      %v366 = vpop.trf.xlu0
      %v367 = vpop.trf.xlu0
      %v368 = vpop.trf.xlu0
      %v369 = vpop.trf.xlu0
      %v370 = vpop.trf.xlu0
      %v371 = vpop.trf.xlu0
      %v372 = vpop.trf.xlu0
      %v373 = vpop.trf.xlu0
      %v374 = vpop.trf.xlu0
      %v375 = vpop.trf.xlu0
      %v376 = vpop.trf.xlu0
      %v377 = vpop.trf.xlu0
      %378 = vxpose.xlu0.b32.start [1/16] %v341, 128
      %379 = vxpose.xlu0.b32.cont [2/16] %v343, 128
      %380 = vxpose.xlu0.b32.cont [3/16] %v345, 128
      %381 = vxpose.xlu0.b32.cont [4/16] 0.0, 128
      %382 = vxpose.xlu0.b32.cont [5/16] 0.0, 128
      %383 = vxpose.xlu0.b32.cont [6/16] 0.0, 128
      %384 = vxpose.xlu0.b32.cont [7/16] 0.0, 128
      %385 = vxpose.xlu0.b32.cont [8/16] 0.0, 128
      %386 = vxpose.xlu0.b32.cont [9/16] 0.0, 128
      %387 = vxpose.xlu0.b32.cont [10/16] 0.0, 128
      %388 = vxpose.xlu0.b32.cont [11/16] 0.0, 128
      %389 = vxpose.xlu0.b32.cont [12/16] 0.0, 128
      %390 = vxpose.xlu0.b32.cont [13/16] 0.0, 128
      %391 = vxpose.xlu0.b32.cont [14/16] 0.0, 128
      %392 = vxpose.xlu0.b32.cont [15/16] 0.0, 128
      %393 = vxpose.xlu0.b32.end [16/16] 0.0, 128
      %v394 = vpop.trf.xlu0
      %v395 = vpop.trf.xlu0
      %v396 = vpop.trf.xlu0
      %v397 = vpop.trf.xlu0
      %v398 = vpop.trf.xlu0
      %v399 = vpop.trf.xlu0
      %v400 = vpop.trf.xlu0
      %v401 = vpop.trf.xlu0
      %v402 = vpop.trf.xlu0
      %v403 = vpop.trf.xlu0
      %v404 = vpop.trf.xlu0
      %v405 = vpop.trf.xlu0
      %v406 = vpop.trf.xlu0
      %v407 = vpop.trf.xlu0
      %v408 = vpop.trf.xlu0
      %v409 = vpop.trf.xlu0
      %vm410 = vcmask 171008
      %411 = vst.msk [vmem:[%s170] sm:$0xff] %vm410, %v362
      %412 = vst.msk [vmem:[%s170 + $0x8] sm:$0xff] %vm410, %v363
      %413 = vst.msk [vmem:[%s170 + $0x10] sm:$0xff] %vm410, %v364
      %414 = vst.msk [vmem:[%s170 + $0x18] sm:$0xff] %vm410, %v365
      %415 = vst.msk [vmem:[%s170 + $0x20] sm:$0xff] %vm410, %v366
      %416 = vst.msk [vmem:[%s170 + $0x28] sm:$0xff] %vm410, %v367
      %417 = vst.msk [vmem:[%s170 + $0x30] sm:$0xff] %vm410, %v368
      %418 = vst.msk [vmem:[%s170 + $0x38] sm:$0xff] %vm410, %v369
      %419 = vst.msk [vmem:[%s170 + $0x40] sm:$0xff] %vm410, %v370
      %420 = vst.msk [vmem:[%s170 + $0x48] sm:$0xff] %vm410, %v371
      %421 = vst.msk [vmem:[%s170 + $0x50] sm:$0xff] %vm410, %v372
      %422 = vst.msk [vmem:[%s170 + $0x58] sm:$0xff] %vm410, %v373
      %423 = vst.msk [vmem:[%s170 + $0x60] sm:$0xff] %vm410, %v374
      %424 = vst.msk [vmem:[%s170 + $0x68] sm:$0xff] %vm410, %v375
      %425 = vst.msk [vmem:[%s170 + $0x70] sm:$0xff] %vm410, %v376
      %426 = vst.msk [vmem:[%s170 + $0x78] sm:$0xff] %vm410, %v377
      %427 = vst.msk [vmem:[%s170 + $0x80] sm:$0xff] %vm410, %v394
      %428 = vst.msk [vmem:[%s170 + $0x88] sm:$0xff] %vm410, %v395
      %429 = vst.msk [vmem:[%s170 + $0x90] sm:$0xff] %vm410, %v396
      %430 = vst.msk [vmem:[%s170 + $0x98] sm:$0xff] %vm410, %v397
      %431 = vst.msk [vmem:[%s170 + $0xa0] sm:$0xff] %vm410, %v398
      %432 = vst.msk [vmem:[%s170 + $0xa8] sm:$0xff] %vm410, %v399
      %433 = vst.msk [vmem:[%s170 + $0xb0] sm:$0xff] %vm410, %v400
      %434 = vst.msk [vmem:[%s170 + $0xb8] sm:$0xff] %vm410, %v401
      %435 = vst.msk [vmem:[%s170 + $0xc0] sm:$0xff] %vm410, %v402
      %436 = vst.msk [vmem:[%s170 + $0xc8] sm:$0xff] %vm410, %v403
      %437 = vst.msk [vmem:[%s170 + $0xd0] sm:$0xff] %vm410, %v404
      %438 = vst.msk [vmem:[%s170 + $0xd8] sm:$0xff] %vm410, %v405
      %439 = vst.msk [vmem:[%s170 + $0xe0] sm:$0xff] %vm410, %v406
      %440 = vst.msk [vmem:[%s170 + $0xe8] sm:$0xff] %vm410, %v407
      %441 = vst.msk [vmem:[%s170 + $0xf0] sm:$0xff] %vm410, %v408
      %442 = vst.msk [vmem:[%s170 + $0xf8] sm:$0xff] %vm410, %v409
      %p443 = scmp.lt.s32.totalorder %s14, 1
      %s444 = scalar_select %p443, %s14, 1
      %s445 = smul.addr %s444, 32
      %s446 = smul.addr %s445, 8
      %s447 = scalar_lea.vmem %s3, %s446
      // Predicated region
      $region33: #{tpu_custom_call.1} parent=31 // pred_check
        %p448 = pneg %p100
      $region34: #{tpu_custom_call.1} parent=31 // pred_check_branch
        %450 = sbr.rel (%p448) target = $region36
      $region35: #{tpu_custom_call.1} parent=31 // pred_region
        _
      $region36: #{tpu_custom_call.1} parent=31 // pred_fallthru
        _
    $region32: #{tpu_custom_call.1} parent=5 // pred_fallthru
      _
    %p451 = scmp.le.s32.totalorder 2, %s9
    // Predicated region
    $region37: #{tpu_custom_call.1} parent=5 // pred_check
      %p452 = pneg %p451
    $region38: #{tpu_custom_call.1} parent=5 // pred_check_branch
      %454 = sbr.rel (%p452) target = $region40
    $region39: #{tpu_custom_call.1} parent=5 // pred_region
      %s455 = ssub.s32 %s9, 2
      // Predicated region
      $region41: #{tpu_custom_call.1} parent=39 // pred_check
        %p456 = pneg %p106
      $region42: #{tpu_custom_call.1} parent=39 // pred_check_branch
        %458 = sbr.rel (%p456) target = $region44
      $region43: #{tpu_custom_call.1} parent=39 // pred_region
        %p459 = scmp.lt.s32.totalorder %s15, 1
        %s460 = scalar_select %p459, %s15, 1
        %s461 = smul.addr %s460, 32
        %s462 = smul.addr %s461, 8
        %s463 = scalar_lea.vmem %s3, %s462
      $region44: #{tpu_custom_call.1} parent=39 // pred_fallthru
        _
    $region40: #{tpu_custom_call.1} parent=5 // pred_fallthru
      _
  $region6: #{tpu_custom_call.1} parent=0 // loop_footer
    %s13 = sadd.s32 1, %s9
  $region7: #{tpu_custom_call.1} parent=0 // loop_footer_branch
    %8 = sbr.rel target = $region3
  $region8: #{tpu_custom_call.1} parent=0 // loop_exit
    _

</llo_original>
